<compile_context>
chip_gen: v7x
topology: tpu7x:2x2x1
jax: 0.10.0
libtpu: 0.0.40
codegen_flags: <defaults>
</compile_context>

<pallas_src>
import jax
import jax.numpy as jnp
from jax.experimental import pallas as pl
from jax.experimental.pallas import tpu as pltpu


_LANES = 512             # lane-axis width of the dense slab (multiple of 128)
_MAX_BLOCK_ROWS = 1024   # 1024 x 512 x 4 B = 2 MiB per block (multiple of 8)
_MAX_ROW_BLOCK = 64 * 1024  # fallback (1, bn) path block width (multiple of 128)


def _scale_kernel(w_ref, x_ref, o_ref):
    # Linear(1, 1, bias=False): y = x * w[0, 0].
    # Scalar weight is read from SMEM and broadcast into a VALU multiply
    # (no vmatmul push/pop, no in-kernel transpose).
    o_ref[...] = x_ref[...] * w_ref[0, 0]


def _pallas_scale(w, x2d, block_shape, index_map, grid):
    return pl.pallas_call(
        _scale_kernel,
        out_shape=jax.ShapeDtypeStruct(x2d.shape, x2d.dtype),
        grid=grid,
        in_specs=[
            # (1, 1) weight stays resident in SMEM across the whole grid.
            pl.BlockSpec(memory_space=pltpu.MemorySpace.SMEM),
            pl.BlockSpec(block_shape, index_map),
        ],
        out_specs=pl.BlockSpec(block_shape, index_map),
        compiler_params=pltpu.CompilerParams(
            dimension_semantics=("parallel",),
        ),
    )(w, x2d)


def linear_nobias_1x1(x, w, *, lanes=_LANES, max_block_rows=_MAX_BLOCK_ROWS):
    """y = x @ w.T for a Linear(1, 1, bias=False) layer (w has shape (1, 1))."""
    n, in_f = x.shape
    out_f, in_f2 = w.shape
    assert in_f == 1 and in_f2 == 1 and out_f == 1, (x.shape, w.shape)

    if n >= lanes and n % lanes == 0:
        # Dense-slab path: full (8,128) vreg occupancy, ~2 MiB blocks.
        rows = n // lanes
        x2d = x.reshape(rows, lanes)
        # block_rows: multiple of 8 (or equal to the full row extent), sized
        # so a block is <= 2 MiB -> 4 double-buffered blocks <= 8 MiB, within
        # v5e's 16 MiB default scoped VMEM (and well under v6e/v7x budgets).
        br = rows if rows <= max_block_rows else max_block_rows
        grid = (pl.cdiv(rows, br),)   # partial last block masked by Pallas
        y2d = _pallas_scale(w, x2d, (br, lanes), lambda i: (i, 0), grid)
        # NOTE: if the consumer can take a flat / lane-dense output, return
        # y2d (or y2d.reshape(n)) directly and skip this (n,1) relayout.
        return y2d.reshape(n, 1)

    # Fallback for small / non-multiple-of-`lanes` batches: lane-dense (1, n)
    # row, no pad; the partial last block (if any) is masked by Pallas.
    x_row = x.reshape(1, n)
    if n <= _MAX_ROW_BLOCK:
        bn = n                 # block == full array dims (always legal)
    else:
        bn = _MAX_ROW_BLOCK    # multiple of 128; last block may be partial
    grid = (pl.cdiv(n, bn),)
    y_row = _pallas_scale(w, x_row, (1, bn), lambda i: (0, i), grid)
    return y_row.reshape(n, 1)


class Net:
    """JAX/Pallas port of the PyTorch Net module."""

    def __init__(self):
        # layer{1,2}.weight: zeroed then += 1 -> all ones, shape (1, 1).
        self.layer1_weight = jnp.ones((1, 1), dtype=jnp.float32)
        self.layer2_weight = jnp.ones((1, 1), dtype=jnp.float32)

    def __call__(self, x, rank=0):
        # layer = 'layer1' if rank is odd else 'layer2' -- static host-side
        # selection, mirroring getattr in the PyTorch forward.
        # TODO(synk): torch.distributed/DDP unused-parameter tracking has no
        # kernel equivalent; `rank` is a plain Python argument here.
        w = self.layer1_weight if rank % 2 == 1 else self.layer2_weight
        return linear_nobias_1x1(x, w)


if __name__ == "__main__":
    net = Net()

    # Small demo input consistent with the PyTorch module: x is (batch, 1).
    key = jax.random.PRNGKey(0)
    batch = 8
    x = jax.random.normal(key, (batch, 1), dtype=jnp.float32)

    y = jax.block_until_ready(net(x, rank=0))   # rank=0 -> layer2 (weight=1)
    ref = x @ net.layer2_weight.T
    assert y.shape == (batch, 1), y.shape
    assert jnp.allclose(y, ref, atol=1e-6)

    # Odd-rank branch + non-multiple-of-128 batch (single full-array block).
    x2 = jax.random.normal(jax.random.PRNGKey(1), (300, 1), dtype=jnp.float32)
    y2 = jax.block_until_ready(net(x2, rank=1))
    assert jnp.allclose(y2, x2 @ net.layer1_weight.T, atol=1e-6)

    # Dense-slab path, single block (rows == 4).
    x3 = jax.random.normal(jax.random.PRNGKey(2), (2048, 1), dtype=jnp.float32)
    y3 = jax.block_until_ready(net(x3, rank=0))
    assert jnp.allclose(y3, x3 @ net.layer2_weight.T, atol=1e-6)

    # Dense-slab path with a multi-step grid and a partial last block
    # (rows=20, block_rows=8 -> grid=3, last block has 4 valid rows).
    x4 = jax.random.normal(jax.random.PRNGKey(3), (20 * 512, 1), dtype=jnp.float32)
    y4 = jax.block_until_ready(
        linear_nobias_1x1(x4, net.layer2_weight, max_block_rows=8))
    assert jnp.allclose(y4, x4 @ net.layer2_weight.T, atol=1e-6)

    print("KERNEL_OK")
</pallas_src>

<mosaic_0001>
module attributes {stable_mosaic.version = 11 : i64} {
  func.func @_scale_kernel(%arg0: i32, %arg1: memref<1x1xf32, #tpu.memory_space<smem>>, %arg2: memref<1x8xf32, #tpu.memory_space<vmem>>, %arg3: memref<1x8xf32, #tpu.memory_space<vmem>>) attributes {dimension_semantics = [#tpu.dimension_semantics<parallel>], iteration_bounds = array<i64: 1>, scalar_prefetch = 0 : i64, scratch_operands = 0 : i64, tpu.core_type = #tpu.core_type<tc>, window_params = [{transform_indices = @transform_0, window_bounds = array<i64: 1, 1>}, {transform_indices = @transform_1, window_bounds = array<i64: 1, 8>}, {transform_indices = @transform_2, window_bounds = array<i64: 1, 8>}]} {
    %c0 = arith.constant 0 : index
    %c0_0 = arith.constant 0 : index
    %0 = vector.load %arg2[%c0, %c0_0] : memref<1x8xf32, #tpu.memory_space<vmem>>, vector<1x8xf32>
    %c0_1 = arith.constant 0 : index
    %c0_2 = arith.constant 0 : index
    %1 = memref.load %arg1[%c0_1, %c0_2] : memref<1x1xf32, #tpu.memory_space<smem>>
    %2 = vector.broadcast %1 : f32 to vector<1x8xf32>
    %3 = arith.mulf %0, %2 : vector<1x8xf32>
    %c0_3 = arith.constant 0 : index
    %c0_4 = arith.constant 0 : index
    %4 = vector.load %arg3[%c0_3, %c0_4] : memref<1x8xf32, #tpu.memory_space<vmem>>, vector<1x8xf32>
    tpu.vector_store %arg3[%c0_3, %c0_4], %3 {strides = array<i32>} : memref<1x8xf32, #tpu.memory_space<vmem>>, vector<1x8xf32>,
    return
  }
  func.func @transform_0(%arg0: i32) -> (i32, i32) {
    %c0_i32 = arith.constant 0 : i32
    %c0_i32_0 = arith.constant 0 : i32
    %c0_i32_1 = arith.constant 0 : i32
    return %c0_i32, %c0_i32_0 : i32, i32
  }
  func.func @transform_1(%arg0: i32) -> (i32, i32) {
    %c0_i32 = arith.constant 0 : i32
    %c0_i32_0 = arith.constant 0 : i32
    return %c0_i32, %arg0 : i32, i32
  }
  func.func @transform_2(%arg0: i32) -> (i32, i32) {
    %c0_i32 = arith.constant 0 : i32
    %c0_i32_0 = arith.constant 0 : i32
    return %c0_i32, %arg0 : i32, i32
  }
}

</mosaic_0001>

<llo_original>
// kernel: tpu_custom_call.1
$region0: #{tpu_custom_call.1}
  #allocation0 [shape = 'u32[]', space=smem, size = 0x4, offset = 0x4, fixed_abs, tag = 'smem constant byte address 0x4 - core index']
  #allocation1 [shape = 'u32[144,128]{1,0:T(1,128)}', space=vmem, size = 0x12000, scoped, tag = 'internal scratch']
  #allocation2 [shape = 'f32[1,1]{1,0:T(1,128)S(6)}', space=smem, size = 0x200, scoped, tag = 'scoped memory for tpu_custom_call.1']
  %s0 = inlined_call_operand.<no memory space> [shape: f32[1,1], index: 0, kind: input, shape index: {}]
  %s1 = inlined_call_operand.vmem [shape: f32[1,8], index: 1, kind: input, shape index: {}]
  %s2 = inlined_call_operand.hbm [shape: f32[1,8], index: 2, kind: output, shape index: {}]
  %s3 = sld [smem:[#allocation0]]
  $region18: #{tpu_custom_call.1} parent=0
    _
  %s5 = ssub.s32 1, %s3
  %s6 = scalar_select 0, %s5, %s3
  %7 = sst [smem:[#allocation2]] %s0
  $region1: #{tpu_custom_call.1} parent=0
    #allocation3 [shape = 'u8[512]{0}', space=vmem, size = 0x400, scoped, tag = 'output window, operand 0, single buffered']
    #allocation4 [shape = 's32[1]{0}', space=sflag, size = 0x4, scoped, tag = 'scoped memory for tpu_custom_call.1']
    %8 = vsyncpa [#allocation4], 0
    // Predicated region
    $region2: #{tpu_custom_call.1} parent=1 // pred_check
      _
    $region3: #{tpu_custom_call.1} parent=1 // pred_check_branch
      %10 = sbr.rel (0) target = $region5
    $region4: #{tpu_custom_call.1} parent=1 // pred_region
      _
    $region5: #{tpu_custom_call.1} parent=1 // pred_fallthru
      _
    // Predicated region
    $region6: #{tpu_custom_call.1} parent=1 // pred_check
      _
    $region7: #{tpu_custom_call.1} parent=1 // pred_check_branch
      %12 = sbr.rel (0) target = $region9
    $region8: #{tpu_custom_call.1} parent=1 // pred_region
      _
    $region9: #{tpu_custom_call.1} parent=1 // pred_fallthru
      _
    %v13 = vld [vmem:[%s1] sm:$0x1]
    %s14 = sld [smem:[#allocation2]]
    %v15 = vstv %s14
    %v16 = vmul.f32 %v13, %v15
    %vm17 = vcmask 57344
    %18 = vst.msk [vmem:[#allocation3] sm:$0x1] %vm17, %v16
    // Predicated region
    $region10: #{tpu_custom_call.1} parent=1 // pred_check
      _
    $region11: #{tpu_custom_call.1} parent=1 // pred_check_branch
      %20 = sbr.rel (0) target = $region13
    $region12: #{tpu_custom_call.1} parent=1 // pred_region
      %s22 = ssub.s32 16, 16
      %23 = vsyncadd [#allocation4], %s22
      %s25 = sshll.u32 [#allocation3], 4
      %s26 = int_to_ptr.vmem [resolvable:$true] %s25
      %28 = dma.vmem_to_hbm [thread:$0]  %s26, 16, %s2, [#allocation4]
    $region13: #{tpu_custom_call.1} parent=1 // pred_fallthru
      _
    // Predicated region
    $region14: #{tpu_custom_call.1} parent=1 // pred_check
      _
    $region15: #{tpu_custom_call.1} parent=1 // pred_check_branch
      %30 = sbr.rel (0) target = $region17
    $region16: #{tpu_custom_call.1} parent=1 // pred_region
      %31 = dma.done [#allocation4], 16
    $region17: #{tpu_custom_call.1} parent=1 // pred_fallthru
      _
    %32 = vsyncpa [#allocation4], 1

</llo_original>
